<compile_context>
chip_gen: v7x
topology: tpu7x:2x2x1
jax: 0.10.0
libtpu: 0.0.40
codegen_flags: <defaults>
</compile_context>

<pallas_src>
import functools

import jax
import jax.numpy as jnp
from jax.experimental import pallas as pl
from jax.experimental.pallas import tpu as pltpu


def _round_up(n: int, m: int) -> int:
    return ((n + m - 1) // m) * m


def dqn_kernel(x_ref, w1_ref, b1_ref, w2_ref, b2_ref, w3_ref, b3_ref, out_ref):
    # x_ref: (TB, S) f32; weights bf16; biases f32; out_ref: (TB, A) f32.
    x = x_ref[...].astype(jnp.bfloat16)
    h1 = jnp.dot(x, w1_ref[...], preferred_element_type=jnp.float32) + b1_ref[...]
    h1 = jnp.maximum(h1, 0.0).astype(jnp.bfloat16)
    h2 = jnp.dot(h1, w2_ref[...], preferred_element_type=jnp.float32) + b2_ref[...]
    h2 = jnp.maximum(h2, 0.0).astype(jnp.bfloat16)
    out_ref[...] = (
        jnp.dot(h2, w3_ref[...], preferred_element_type=jnp.float32) + b3_ref[...]
    )


@functools.partial(jax.jit, static_argnames=("tb",))
def dqn_forward(x, params, tb: int = 1024):
    """x: (B, state_size) float32. params: dict of w1,b1,w2,b2,w3,b3 ((in,out) weights)."""
    B, S = x.shape
    H1 = params["w1"].shape[1]
    H2 = params["w2"].shape[1]
    A = params["w3"].shape[1]

    # Batch tile: multiple of 8 (sublane), <= tb, and capped so the batch grid has
    # >= 2 steps when the batch is large enough (lets v7x shard across its 2 TCs).
    B8 = _round_up(B, 8)
    TB = max(8, min(tb, _round_up((B8 + 1) // 2, 8)))
    B_pad = _round_up(B, TB)

    # Only emit a pad op when actually needed (common case: no extra XLA pass on x).
    x_p = x if B_pad == B else jnp.zeros((B_pad, S), x.dtype).at[:B].set(x)

    bf16 = jnp.bfloat16
    w1 = params["w1"].astype(bf16)
    w2 = params["w2"].astype(bf16)
    w3 = params["w3"].astype(bf16)
    b1 = params["b1"].astype(jnp.float32).reshape(1, H1)
    b2 = params["b2"].astype(jnp.float32).reshape(1, H2)
    b3 = params["b3"].astype(jnp.float32).reshape(1, A)

    grid = (B_pad // TB,)

    # Honest (unpadded-width) advisory cost for XLA's scheduler.
    flops = 2 * B_pad * (S * H1 + H1 * H2 + H2 * A)
    bytes_accessed = (
        B_pad * S * x.dtype.itemsize
        + (w1.size + w2.size + w3.size) * 2
        + (b1.size + b2.size + b3.size) * 4
        + B_pad * A * 4
    )

    # Double-buffered x / out tiles + resident weights.  Only raise the scoped-VMEM
    # limit if we would actually exceed the smallest default (v5e: 16 MiB).
    vmem_bytes = (
        2 * TB * S * x.dtype.itemsize
        + 2 * TB * A * 4
        + (w1.size + w2.size + w3.size) * 2
        + (b1.size + b2.size + b3.size) * 4
    )
    vmem_limit = None
    if vmem_bytes > 8 * 1024 * 1024:
        vmem_limit = min(120 * 1024 * 1024, 2 * int(vmem_bytes) + (4 << 20))

    out = pl.pallas_call(
        dqn_kernel,
        out_shape=jax.ShapeDtypeStruct((B_pad, A), jnp.float32),
        grid_spec=pltpu.PrefetchScalarGridSpec(
            num_scalar_prefetch=0,
            grid=grid,
            in_specs=[
                pl.BlockSpec((TB, S), lambda i: (i, 0)),    # x tile (pipelined)
                pl.BlockSpec((S, H1), lambda i: (0, 0)),    # w1 (resident)
                pl.BlockSpec((1, H1), lambda i: (0, 0)),    # b1
                pl.BlockSpec((H1, H2), lambda i: (0, 0)),   # w2
                pl.BlockSpec((1, H2), lambda i: (0, 0)),    # b2
                pl.BlockSpec((H2, A), lambda i: (0, 0)),    # w3
                pl.BlockSpec((1, A), lambda i: (0, 0)),     # b3
            ],
            out_specs=pl.BlockSpec((TB, A), lambda i: (i, 0)),
        ),
        compiler_params=pltpu.CompilerParams(
            dimension_semantics=("parallel",),
            vmem_limit_bytes=vmem_limit,
        ),
        cost_estimate=pl.CostEstimate(
            flops=flops, transcendentals=0, bytes_accessed=bytes_accessed
        ),
    )(x_p, w1, b1, w2, b2, w3, b3)

    return out[:B]


def init_params(key, state_size, action_size):
    """Deterministic init mimicking nn.Linear default (uniform +/-1/sqrt(fan_in)).
    Weights stored as (in, out); biases stored as (1, out)."""
    k1, k2, k3, k4, k5, k6 = jax.random.split(key, 6)

    def lin(kw, kb, fan_in, fan_out):
        bound = 1.0 / jnp.sqrt(jnp.float32(fan_in))
        w = jax.random.uniform(kw, (fan_in, fan_out), jnp.float32, -bound, bound)
        b = jax.random.uniform(kb, (1, fan_out), jnp.float32, -bound, bound)
        return w, b

    w1, b1 = lin(k1, k2, state_size, 128)
    w2, b2 = lin(k3, k4, 128, 256)
    w3, b3 = lin(k5, k6, 256, action_size)
    return {"w1": w1, "b1": b1, "w2": w2, "b2": b2, "w3": w3, "b3": b3}


def dqn_reference(x, params):
    """Reference with the same bf16-input / f32-accumulate numerics as the kernel."""
    bf16 = jnp.bfloat16
    xb = x.astype(bf16)
    h1 = jnp.dot(xb, params["w1"].astype(bf16), preferred_element_type=jnp.float32)
    h1 = jnp.maximum(h1 + params["b1"], 0.0).astype(bf16)
    h2 = jnp.dot(h1, params["w2"].astype(bf16), preferred_element_type=jnp.float32)
    h2 = jnp.maximum(h2 + params["b2"], 0.0).astype(bf16)
    out = jnp.dot(h2, params["w3"].astype(bf16), preferred_element_type=jnp.float32)
    return out + params["b3"]


def dqn_reference_f32(x, params):
    h1 = jnp.maximum(x @ params["w1"] + params["b1"], 0.0)
    h2 = jnp.maximum(h1 @ params["w2"] + params["b2"], 0.0)
    return h2 @ params["w3"] + params["b3"]


if __name__ == "__main__":
    key = jax.random.PRNGKey(0)
    state_size = 32
    action_size = 16

    kx, kp, kx2 = jax.random.split(key, 3)
    params = init_params(kp, state_size, action_size)

    # Small primary case (batch=8): single grid step, no padding path.
    x = jax.random.normal(kx, (8, state_size), dtype=jnp.float32)
    actions = jax.block_until_ready(dqn_forward(x, params))
    assert actions.shape == (8, action_size)
    ref = dqn_reference(x, params)
    assert jnp.allclose(actions, ref, atol=1e-3, rtol=1e-3), (
        float(jnp.max(jnp.abs(actions - ref)))
    )
    assert jnp.allclose(actions, dqn_reference_f32(x, params), atol=5e-2, rtol=5e-2)

    # Odd batch (=50): exercises the >=2-step parallel grid and the batch-pad/slice path.
    x2 = jax.random.normal(kx2, (50, state_size), dtype=jnp.float32)
    actions2 = jax.block_until_ready(dqn_forward(x2, params))
    assert actions2.shape == (50, action_size)
    ref2 = dqn_reference(x2, params)
    assert jnp.allclose(actions2, ref2, atol=1e-3, rtol=1e-3), (
        float(jnp.max(jnp.abs(actions2 - ref2)))
    )

    print("KERNEL_OK")
</pallas_src>

<mosaic_0001>
module attributes {stable_mosaic.version = 11 : i64} {
  func.func @dqn_kernel(%arg0: i32, %arg1: memref<8x32xf32, #tpu.memory_space<vmem>>, %arg2: memref<32x128xbf16, #tpu.memory_space<vmem>>, %arg3: memref<1x128xf32, #tpu.memory_space<vmem>>, %arg4: memref<128x256xbf16, #tpu.memory_space<vmem>>, %arg5: memref<1x256xf32, #tpu.memory_space<vmem>>, %arg6: memref<256x16xbf16, #tpu.memory_space<vmem>>, %arg7: memref<1x16xf32, #tpu.memory_space<vmem>>, %arg8: memref<8x16xf32, #tpu.memory_space<vmem>>) attributes {dimension_semantics = [#tpu.dimension_semantics<parallel>], iteration_bounds = array<i64: 1>, scalar_prefetch = 0 : i64, scratch_operands = 0 : i64, tpu.core_type = #tpu.core_type<tc>, window_params = [{transform_indices = @transform_0, window_bounds = array<i64: 8, 32>}, {pipeline_mode = #tpu.pipeline_mode<synchronous>, transform_indices = @transform_1, window_bounds = array<i64: 32, 128>}, {pipeline_mode = #tpu.pipeline_mode<synchronous>, transform_indices = @transform_2, window_bounds = array<i64: 1, 128>}, {pipeline_mode = #tpu.pipeline_mode<synchronous>, transform_indices = @transform_3, window_bounds = array<i64: 128, 256>}, {pipeline_mode = #tpu.pipeline_mode<synchronous>, transform_indices = @transform_4, window_bounds = array<i64: 1, 256>}, {pipeline_mode = #tpu.pipeline_mode<synchronous>, transform_indices = @transform_5, window_bounds = array<i64: 256, 16>}, {pipeline_mode = #tpu.pipeline_mode<synchronous>, transform_indices = @transform_6, window_bounds = array<i64: 1, 16>}, {transform_indices = @transform_7, window_bounds = array<i64: 8, 16>}]} {
    %c0 = arith.constant 0 : index
    %c0_0 = arith.constant 0 : index
    %0 = vector.load %arg1[%c0, %c0_0] : memref<8x32xf32, #tpu.memory_space<vmem>>, vector<8x32xf32>
    %1 = arith.truncf %0 : vector<8x32xf32> to vector<8x32xbf16>
    %c0_1 = arith.constant 0 : index
    %c0_2 = arith.constant 0 : index
    %2 = vector.load %arg2[%c0_1, %c0_2] : memref<32x128xbf16, #tpu.memory_space<vmem>>, vector<32x128xbf16>
    %cst = arith.constant dense<0.000000e+00> : vector<8x128xf32>
    %3 = tpu.matmul %1, %2, %cst {dimension_numbers = #tpu.dot_dimension_numbers<[1], [0], [0], [1], [0, 0, 1, 1], [], []>} : vector<8x32xbf16>, vector<32x128xbf16>, vector<8x128xf32> -> vector<8x128xf32>
    %c0_3 = arith.constant 0 : index
    %c0_4 = arith.constant 0 : index
    %4 = vector.load %arg3[%c0_3, %c0_4] : memref<1x128xf32, #tpu.memory_space<vmem>>, vector<1x128xf32>
    %5 = vector.broadcast %4 : vector<1x128xf32> to vector<8x128xf32>
    %6 = arith.addf %3, %5 : vector<8x128xf32>
    %cst_5 = arith.constant 0.000000e+00 : f32
    %7 = vector.broadcast %cst_5 : f32 to vector<8x128xf32>
    %8 = arith.maximumf %6, %7 : vector<8x128xf32>
    %9 = arith.truncf %8 : vector<8x128xf32> to vector<8x128xbf16>
    %c0_6 = arith.constant 0 : index
    %c0_7 = arith.constant 0 : index
    %10 = vector.load %arg4[%c0_6, %c0_7] : memref<128x256xbf16, #tpu.memory_space<vmem>>, vector<128x256xbf16>
    %cst_8 = arith.constant dense<0.000000e+00> : vector<8x256xf32>
    %11 = tpu.matmul %9, %10, %cst_8 {dimension_numbers = #tpu.dot_dimension_numbers<[1], [0], [0], [1], [0, 0, 1, 1], [], []>} : vector<8x128xbf16>, vector<128x256xbf16>, vector<8x256xf32> -> vector<8x256xf32>
    %c0_9 = arith.constant 0 : index
    %c0_10 = arith.constant 0 : index
    %12 = vector.load %arg5[%c0_9, %c0_10] : memref<1x256xf32, #tpu.memory_space<vmem>>, vector<1x256xf32>
    %13 = vector.broadcast %12 : vector<1x256xf32> to vector<8x256xf32>
    %14 = arith.addf %11, %13 : vector<8x256xf32>
    %cst_11 = arith.constant 0.000000e+00 : f32
    %15 = vector.broadcast %cst_11 : f32 to vector<8x256xf32>
    %16 = arith.maximumf %14, %15 : vector<8x256xf32>
    %17 = arith.truncf %16 : vector<8x256xf32> to vector<8x256xbf16>
    %c0_12 = arith.constant 0 : index
    %c0_13 = arith.constant 0 : index
    %18 = vector.load %arg6[%c0_12, %c0_13] : memref<256x16xbf16, #tpu.memory_space<vmem>>, vector<256x16xbf16>
    %cst_14 = arith.constant dense<0.000000e+00> : vector<8x16xf32>
    %19 = tpu.matmul %17, %18, %cst_14 {dimension_numbers = #tpu.dot_dimension_numbers<[1], [0], [0], [1], [0, 0, 1, 1], [], []>} : vector<8x256xbf16>, vector<256x16xbf16>, vector<8x16xf32> -> vector<8x16xf32>
    %c0_15 = arith.constant 0 : index
    %c0_16 = arith.constant 0 : index
    %20 = vector.load %arg7[%c0_15, %c0_16] : memref<1x16xf32, #tpu.memory_space<vmem>>, vector<1x16xf32>
    %21 = vector.broadcast %20 : vector<1x16xf32> to vector<8x16xf32>
    %22 = arith.addf %19, %21 : vector<8x16xf32>
    %c0_17 = arith.constant 0 : index
    %c0_18 = arith.constant 0 : index
    %23 = vector.load %arg8[%c0_17, %c0_18] : memref<8x16xf32, #tpu.memory_space<vmem>>, vector<8x16xf32>
    tpu.vector_store %arg8[%c0_17, %c0_18], %22 {strides = array<i32>} : memref<8x16xf32, #tpu.memory_space<vmem>>, vector<8x16xf32>,
    return
  }
  func.func @transform_0(%arg0: i32) -> (i32, i32) {
    %c0_i32 = arith.constant 0 : i32
    %c0_i32_0 = arith.constant 0 : i32
    return %arg0, %c0_i32 : i32, i32
  }
  func.func @transform_1(%arg0: i32) -> (i32, i32) {
    %c0_i32 = arith.constant 0 : i32
    %c0_i32_0 = arith.constant 0 : i32
    %c0_i32_1 = arith.constant 0 : i32
    return %c0_i32, %c0_i32_0 : i32, i32
  }
  func.func @transform_2(%arg0: i32) -> (i32, i32) {
    %c0_i32 = arith.constant 0 : i32
    %c0_i32_0 = arith.constant 0 : i32
    %c0_i32_1 = arith.constant 0 : i32
    return %c0_i32, %c0_i32_0 : i32, i32
  }
  func.func @transform_3(%arg0: i32) -> (i32, i32) {
    %c0_i32 = arith.constant 0 : i32
    %c0_i32_0 = arith.constant 0 : i32
    %c0_i32_1 = arith.constant 0 : i32
    return %c0_i32, %c0_i32_0 : i32, i32
  }
  func.func @transform_4(%arg0: i32) -> (i32, i32) {
    %c0_i32 = arith.constant 0 : i32
    %c0_i32_0 = arith.constant 0 : i32
    %c0_i32_1 = arith.constant 0 : i32
    return %c0_i32, %c0_i32_0 : i32, i32
  }
  func.func @transform_5(%arg0: i32) -> (i32, i32) {
    %c0_i32 = arith.constant 0 : i32
    %c0_i32_0 = arith.constant 0 : i32
    %c0_i32_1 = arith.constant 0 : i32
    return %c0_i32, %c0_i32_0 : i32, i32
  }
  func.func @transform_6(%arg0: i32) -> (i32, i32) {
    %c0_i32 = arith.constant 0 : i32
    %c0_i32_0 = arith.constant 0 : i32
    %c0_i32_1 = arith.constant 0 : i32
    return %c0_i32, %c0_i32_0 : i32, i32
  }
  func.func @transform_7(%arg0: i32) -> (i32, i32) {
    %c0_i32 = arith.constant 0 : i32
    %c0_i32_0 = arith.constant 0 : i32
    return %arg0, %c0_i32 : i32, i32
  }
}

</mosaic_0001>

<llo_original>
// kernel: dqn_forward.1
$region0: #{dqn_forward.1}
  #allocation0 [shape = 'u32[]', space=smem, size = 0x4, offset = 0x4, fixed_abs, tag = 'smem constant byte address 0x4 - core index']
  #allocation1 [shape = 'u32[144,128]{1,0:T(1,128)}', space=vmem, size = 0x12000, scoped, tag = 'internal scratch']
  %s0 = inlined_call_operand.vmem [shape: f32[8,32], index: 0, kind: input, shape index: {}]
  %s1 = inlined_call_operand.vmem [shape: bf16[32,128], index: 1, kind: input, shape index: {}]
  %s2 = inlined_call_operand.vmem [shape: f32[1,128], index: 2, kind: input, shape index: {}]
  %s3 = inlined_call_operand.vmem [shape: bf16[128,256], index: 3, kind: input, shape index: {}]
  %s4 = inlined_call_operand.vmem [shape: f32[1,256], index: 4, kind: input, shape index: {}]
  %s5 = inlined_call_operand.vmem [shape: bf16[256,16], index: 5, kind: input, shape index: {}]
  %s6 = inlined_call_operand.vmem [shape: f32[1,16], index: 6, kind: input, shape index: {}]
  %s7 = inlined_call_operand.hbm [shape: f32[8,16], index: 7, kind: output, shape index: {}]
  %s8 = sld [smem:[#allocation0]]
  $region38: #{dqn_forward.1} parent=0
    _
  %s10 = ssub.s32 1, %s8
  %s11 = scalar_select 0, %s10, %s8
  $region1: #{dqn_forward.1} parent=0
    #allocation2 [shape = 'u8[4096]{0}', space=vmem, size = 0x1000, scoped, tag = 'output window, operand 0, single buffered']
    #allocation3 [shape = 's32[1]{0}', space=sflag, size = 0x4, scoped, tag = 'scoped memory for dqn_forward.1']
    %12 = vsyncpa [#allocation3], 0
    // Predicated region
    $region2: #{dqn_forward.1} parent=1 // pred_check
      _
    $region3: #{dqn_forward.1} parent=1 // pred_check_branch
      %14 = sbr.rel (0) target = $region5
    $region4: #{dqn_forward.1} parent=1 // pred_region
      _
    $region5: #{dqn_forward.1} parent=1 // pred_fallthru
      _
    // Predicated region
    $region6: #{dqn_forward.1} parent=1 // pred_check
      _
    $region7: #{dqn_forward.1} parent=1 // pred_check_branch
      %16 = sbr.rel (0) target = $region9
    $region8: #{dqn_forward.1} parent=1 // pred_region
      _
    $region9: #{dqn_forward.1} parent=1 // pred_fallthru
      _
    // Predicated region
    $region10: #{dqn_forward.1} parent=1 // pred_check
      _
    $region11: #{dqn_forward.1} parent=1 // pred_check_branch
      %18 = sbr.rel (0) target = $region13
    $region12: #{dqn_forward.1} parent=1 // pred_region
      _
    $region13: #{dqn_forward.1} parent=1 // pred_fallthru
      _
    // Predicated region
    $region14: #{dqn_forward.1} parent=1 // pred_check
      _
    $region15: #{dqn_forward.1} parent=1 // pred_check_branch
      %20 = sbr.rel (0) target = $region17
    $region16: #{dqn_forward.1} parent=1 // pred_region
      _
    $region17: #{dqn_forward.1} parent=1 // pred_fallthru
      _
    // Predicated region
    $region18: #{dqn_forward.1} parent=1 // pred_check
      _
    $region19: #{dqn_forward.1} parent=1 // pred_check_branch
      %22 = sbr.rel (0) target = $region21
    $region20: #{dqn_forward.1} parent=1 // pred_region
      _
    $region21: #{dqn_forward.1} parent=1 // pred_fallthru
      _
    // Predicated region
    $region22: #{dqn_forward.1} parent=1 // pred_check
      _
    $region23: #{dqn_forward.1} parent=1 // pred_check_branch
      %24 = sbr.rel (0) target = $region25
    $region24: #{dqn_forward.1} parent=1 // pred_region
      _
    $region25: #{dqn_forward.1} parent=1 // pred_fallthru
      _
    // Predicated region
    $region26: #{dqn_forward.1} parent=1 // pred_check
      _
    $region27: #{dqn_forward.1} parent=1 // pred_check_branch
      %26 = sbr.rel (0) target = $region29
    $region28: #{dqn_forward.1} parent=1 // pred_region
      _
    $region29: #{dqn_forward.1} parent=1 // pred_fallthru
      _
    %v28 = vld [vmem:[%s0] sm:$0xff]
    %v29 = vpack.c.bf16 %v28, %v28
    %v30 = vld [vmem:[%s1] sm:$0xf]
    %v31 = vld [vmem:[%s1 + $0x4] sm:$0xf]
    %v32 = vld [vmem:[%s1 + $0x8] sm:$0xf]
    %v33 = vld [vmem:[%s1 + $0xc] sm:$0xf]
    %v34 = vld [vmem:[%s2] sm:$0x1]
    %v36 = vlaneseq
    %v37 = vshrl.u32 %v36, 7
    %v38 = vsub.s32 0, %v37
    %v39 = vrot.slane %v34, %v38
    %v45 = vunpack.c.l.b16 %v30
    %v46 = vunpack.c.l.b16 %v31
    %v47 = vunpack.c.l.b16 %v32
    %v48 = vunpack.c.l.b16 %v33
    %v49 = vpack.c.b16 %v46, %v45
    %v50 = vpack.c.b16 %v48, %v47
    %vm53 = vcmask 261120
    %v55 = vsel %vm53, %v29, 0
    %57 = vmatprep.subr.bf16.mxu0 0
    %58 = vmatpush1.bf16.msra.mxu0 %v49
    %59 = vmatprep.subr.bf16.mxu0 0
    %60 = vmatpush1.bf16.msra.mxu0 %v50
    %61 = vmatprep.subr.bf16.mxu0 0
    %62 = vmatpush1.bf16.msra.mxu0 0
    %63 = vmatprep.subr.bf16.mxu0 0
    %64 = vmatpush1.bf16.msra.mxu0 0
    %65 = vmatprep.subr.bf16.mxu0 0
    %66 = vmatpush1.bf16.msra.mxu0 0
    %67 = vmatprep.subr.bf16.mxu0 0
    %68 = vmatpush1.bf16.msra.mxu0 0
    %69 = vmatprep.subr.bf16.mxu0 0
    %70 = vmatpush1.bf16.msra.mxu0 0
    %71 = vmatprep.subr.bf16.mxu0 0
    %72 = vmatpush1.bf16.msra.mxu0 0
    %73 = vmatprep.subr.bf16.mxu0 0
    %74 = vmatpush1.bf16.msra.mxu0 0
    %75 = vmatprep.subr.bf16.mxu0 0
    %76 = vmatpush1.bf16.msra.mxu0 0
    %77 = vmatprep.subr.bf16.mxu0 0
    %78 = vmatpush1.bf16.msra.mxu0 0
    %79 = vmatprep.subr.bf16.mxu0 0
    %80 = vmatpush1.bf16.msra.mxu0 0
    %81 = vmatprep.subr.bf16.mxu0 0
    %82 = vmatpush1.bf16.msra.mxu0 0
    %83 = vmatprep.subr.bf16.mxu0 0
    %84 = vmatpush1.bf16.msra.mxu0 0
    %85 = vmatprep.subr.bf16.mxu0 0
    %86 = vmatpush1.bf16.msra.mxu0 0
    %87 = vmatprep.subr.bf16.mxu0 0
    %88 = vmatpush1.bf16.msra.mxu0 0
    %89 = vmatprep.mubr.bf16.mxu0 0
    %90 = vmatmul.mubr.bf16.gmra.mrb[0].mxu0 %v55
    %v91 = vpop.f32.mrb[0].mxu0
    %v92 = vadd.f32 %v39, %v91
    %v93 = vpop.f32.mrb[0].mxu0
    %v94 = vpop.f32.mrb[0].mxu0
    %v95 = vpop.f32.mrb[0].mxu0
    %96 = vdwg.mxu0
    %v97 = vmax.f32 %v92, 0.0
    %v98 = vpack.c.bf16 %v97, %v97
    %v99 = vld [vmem:[%s3] sm:$0xff]
    %v100 = vld [vmem:[%s3 + $0x8] sm:$0xff]
    %v101 = vld [vmem:[%s3 + $0x10] sm:$0xff]
    %v102 = vld [vmem:[%s3 + $0x18] sm:$0xff]
    %v103 = vld [vmem:[%s3 + $0x20] sm:$0xff]
    %v104 = vld [vmem:[%s3 + $0x28] sm:$0xff]
    %v105 = vld [vmem:[%s3 + $0x30] sm:$0xff]
    %v106 = vld [vmem:[%s3 + $0x38] sm:$0xff]
    %v107 = vld [vmem:[%s3 + $0x40] sm:$0xff]
    %v108 = vld [vmem:[%s3 + $0x48] sm:$0xff]
    %v109 = vld [vmem:[%s3 + $0x50] sm:$0xff]
    %v110 = vld [vmem:[%s3 + $0x58] sm:$0xff]
    %v111 = vld [vmem:[%s3 + $0x60] sm:$0xff]
    %v112 = vld [vmem:[%s3 + $0x68] sm:$0xff]
    %v113 = vld [vmem:[%s3 + $0x70] sm:$0xff]
    %v114 = vld [vmem:[%s3 + $0x78] sm:$0xff]
    %v115 = vld [vmem:[%s4] sm:$0x3]
    %v117 = vlaneseq
    %v118 = vshrl.u32 %v117, 7
    %v119 = vsub.s32 0, %v118
    %v120 = vrot.slane %v115, %v119
    %v121 = vlaneseq
    %v122 = vshrl.u32 %v121, 7
    %v123 = vsub.s32 1, %v122
    %v124 = vrot.slane %v115, %v123
    %v143 = vunpack.c.l.b16 %v99
    %v144 = vunpack.c.h.b16 %v99
    %v145 = vunpack.c.l.b16 %v100
    %v146 = vunpack.c.h.b16 %v100
    %v147 = vunpack.c.l.b16 %v101
    %v148 = vunpack.c.h.b16 %v101
    %v149 = vunpack.c.l.b16 %v102
    %v150 = vunpack.c.h.b16 %v102
    %v151 = vunpack.c.l.b16 %v103
    %v152 = vunpack.c.h.b16 %v103
    %v153 = vunpack.c.l.b16 %v104
    %v154 = vunpack.c.h.b16 %v104
    %v155 = vunpack.c.l.b16 %v105
    %v156 = vunpack.c.h.b16 %v105
    %v157 = vunpack.c.l.b16 %v106
    %v158 = vunpack.c.h.b16 %v106
    %v159 = vunpack.c.l.b16 %v107
    %v160 = vunpack.c.h.b16 %v107
    %v161 = vunpack.c.l.b16 %v108
    %v162 = vunpack.c.h.b16 %v108
    %v163 = vunpack.c.l.b16 %v109
    %v164 = vunpack.c.h.b16 %v109
    %v165 = vunpack.c.l.b16 %v110
    %v166 = vunpack.c.h.b16 %v110
    %v167 = vunpack.c.l.b16 %v111
    %v168 = vunpack.c.h.b16 %v111
    %v169 = vunpack.c.l.b16 %v112
    %v170 = vunpack.c.h.b16 %v112
    %v171 = vunpack.c.l.b16 %v113
    %v172 = vunpack.c.h.b16 %v113
    %v173 = vunpack.c.l.b16 %v114
    %v174 = vunpack.c.h.b16 %v114
    %v175 = vpack.c.b16 %v145, %v143
    %v176 = vpack.c.b16 %v146, %v144
    %v177 = vpack.c.b16 %v149, %v147
    %v178 = vpack.c.b16 %v150, %v148
    %v179 = vpack.c.b16 %v153, %v151
    %v180 = vpack.c.b16 %v154, %v152
    %v181 = vpack.c.b16 %v157, %v155
    %v182 = vpack.c.b16 %v158, %v156
    %v183 = vpack.c.b16 %v161, %v159
    %v184 = vpack.c.b16 %v162, %v160
    %v185 = vpack.c.b16 %v165, %v163
    %v186 = vpack.c.b16 %v166, %v164
    %v187 = vpack.c.b16 %v169, %v167
    %v188 = vpack.c.b16 %v170, %v168
    %v189 = vpack.c.b16 %v173, %v171
    %v190 = vpack.c.b16 %v174, %v172
    %207 = vmatprep.subr.bf16.mxu0 %v176
    %208 = vmatpush1.bf16.msra.mxu0 %v175
    %209 = vmatprep.subr.bf16.mxu0 %v178
    %210 = vmatpush1.bf16.msra.mxu0 %v177
    %211 = vmatprep.subr.bf16.mxu0 %v180
    %212 = vmatpush1.bf16.msra.mxu0 %v179
    %213 = vmatprep.subr.bf16.mxu0 %v182
    %214 = vmatpush1.bf16.msra.mxu0 %v181
    %215 = vmatprep.subr.bf16.mxu0 %v184
    %216 = vmatpush1.bf16.msra.mxu0 %v183
    %217 = vmatprep.subr.bf16.mxu0 %v186
    %218 = vmatpush1.bf16.msra.mxu0 %v185
    %219 = vmatprep.subr.bf16.mxu0 %v188
    %220 = vmatpush1.bf16.msra.mxu0 %v187
    %221 = vmatprep.subr.bf16.mxu0 %v190
    %222 = vmatpush1.bf16.msra.mxu0 %v189
    %223 = vmatprep.subr.bf16.mxu0 0
    %224 = vmatpush1.bf16.msra.mxu0 0
    %225 = vmatprep.subr.bf16.mxu0 0
    %226 = vmatpush1.bf16.msra.mxu0 0
    %227 = vmatprep.subr.bf16.mxu0 0
    %228 = vmatpush1.bf16.msra.mxu0 0
    %229 = vmatprep.subr.bf16.mxu0 0
    %230 = vmatpush1.bf16.msra.mxu0 0
    %231 = vmatprep.subr.bf16.mxu0 0
    %232 = vmatpush1.bf16.msra.mxu0 0
    %233 = vmatprep.subr.bf16.mxu0 0
    %234 = vmatpush1.bf16.msra.mxu0 0
    %235 = vmatprep.subr.bf16.mxu0 0
    %236 = vmatpush1.bf16.msra.mxu0 0
    %237 = vmatprep.subr.bf16.mxu0 0
    %238 = vmatpush1.bf16.msra.mxu0 0
    %239 = vmatprep.mubr.bf16.mxu0 0
    %240 = vmatmul.mubr.bf16.gmra.mrb[0].mxu0 %v98
    %v241 = vpop.f32.mrb[0].mxu0
    %v242 = vadd.f32 %v120, %v241
    %v243 = vpop.f32.mrb[0].mxu0
    %v244 = vadd.f32 %v124, %v243
    %v245 = vpop.f32.mrb[0].mxu0
    %v246 = vpop.f32.mrb[0].mxu0
    %247 = vdwg.mxu0
    %v248 = vmax.f32 %v242, 0.0
    %v249 = vmax.f32 %v244, 0.0
    %v250 = vpack.c.bf16 %v248, %v248
    %v251 = vpack.c.bf16 %v249, %v249
    %v252 = vld [vmem:[%s5] sm:$0xf]
    %v253 = vld [vmem:[%s5 + $0x4] sm:$0xf]
    %v254 = vld [vmem:[%s5 + $0x8] sm:$0xf]
    %v255 = vld [vmem:[%s5 + $0xc] sm:$0xf]
    %v256 = vld [vmem:[%s5 + $0x10] sm:$0xf]
    %v257 = vld [vmem:[%s5 + $0x14] sm:$0xf]
    %v258 = vld [vmem:[%s5 + $0x18] sm:$0xf]
    %v259 = vld [vmem:[%s5 + $0x1c] sm:$0xf]
    %v260 = vld [vmem:[%s5 + $0x20] sm:$0xf]
    %v261 = vld [vmem:[%s5 + $0x24] sm:$0xf]
    %v262 = vld [vmem:[%s5 + $0x28] sm:$0xf]
    %v263 = vld [vmem:[%s5 + $0x2c] sm:$0xf]
    %v264 = vld [vmem:[%s5 + $0x30] sm:$0xf]
    %v265 = vld [vmem:[%s5 + $0x34] sm:$0xf]
    %v266 = vld [vmem:[%s5 + $0x38] sm:$0xf]
    %v267 = vld [vmem:[%s5 + $0x3c] sm:$0xf]
    %v268 = vld [vmem:[%s5 + $0x40] sm:$0xf]
    %v269 = vld [vmem:[%s5 + $0x44] sm:$0xf]
    %v270 = vld [vmem:[%s5 + $0x48] sm:$0xf]
    %v271 = vld [vmem:[%s5 + $0x4c] sm:$0xf]
    %v272 = vld [vmem:[%s5 + $0x50] sm:$0xf]
    %v273 = vld [vmem:[%s5 + $0x54] sm:$0xf]
    %v274 = vld [vmem:[%s5 + $0x58] sm:$0xf]
    %v275 = vld [vmem:[%s5 + $0x5c] sm:$0xf]
    %v276 = vld [vmem:[%s5 + $0x60] sm:$0xf]
    %v277 = vld [vmem:[%s5 + $0x64] sm:$0xf]
    %v278 = vld [vmem:[%s5 + $0x68] sm:$0xf]
    %v279 = vld [vmem:[%s5 + $0x6c] sm:$0xf]
    %v280 = vld [vmem:[%s5 + $0x70] sm:$0xf]
    %v281 = vld [vmem:[%s5 + $0x74] sm:$0xf]
    %v282 = vld [vmem:[%s5 + $0x78] sm:$0xf]
    %v283 = vld [vmem:[%s5 + $0x7c] sm:$0xf]
    %v284 = vld [vmem:[%s6] sm:$0x1]
    %v286 = vlaneseq
    %v287 = vshrl.u32 %v286, 7
    %v288 = vsub.s32 0, %v287
    %v289 = vrot.slane %v284, %v288
    %v323 = vunpack.c.l.b16 %v252
    %v324 = vunpack.c.l.b16 %v253
    %v325 = vunpack.c.l.b16 %v254
    %v326 = vunpack.c.l.b16 %v255
    %v327 = vunpack.c.l.b16 %v256
    %v328 = vunpack.c.l.b16 %v257
    %v329 = vunpack.c.l.b16 %v258
    %v330 = vunpack.c.l.b16 %v259
    %v331 = vunpack.c.l.b16 %v260
    %v332 = vunpack.c.l.b16 %v261
    %v333 = vunpack.c.l.b16 %v262
    %v334 = vunpack.c.l.b16 %v263
    %v335 = vunpack.c.l.b16 %v264
    %v336 = vunpack.c.l.b16 %v265
    %v337 = vunpack.c.l.b16 %v266
    %v338 = vunpack.c.l.b16 %v267
    %v339 = vunpack.c.l.b16 %v268
    %v340 = vunpack.c.l.b16 %v269
    %v341 = vunpack.c.l.b16 %v270
    %v342 = vunpack.c.l.b16 %v271
    %v343 = vunpack.c.l.b16 %v272
    %v344 = vunpack.c.l.b16 %v273
    %v345 = vunpack.c.l.b16 %v274
    %v346 = vunpack.c.l.b16 %v275
    %v347 = vunpack.c.l.b16 %v276
    %v348 = vunpack.c.l.b16 %v277
    %v349 = vunpack.c.l.b16 %v278
    %v350 = vunpack.c.l.b16 %v279
    %v351 = vunpack.c.l.b16 %v280
    %v352 = vunpack.c.l.b16 %v281
    %v353 = vunpack.c.l.b16 %v282
    %v354 = vunpack.c.l.b16 %v283
    %v355 = vpack.c.b16 %v324, %v323
    %v356 = vpack.c.b16 %v326, %v325
    %v357 = vpack.c.b16 %v328, %v327
    %v358 = vpack.c.b16 %v330, %v329
    %v359 = vpack.c.b16 %v332, %v331
    %v360 = vpack.c.b16 %v334, %v333
    %v361 = vpack.c.b16 %v336, %v335
    %v362 = vpack.c.b16 %v338, %v337
    %v363 = vpack.c.b16 %v340, %v339
    %v364 = vpack.c.b16 %v342, %v341
    %v365 = vpack.c.b16 %v344, %v343
    %v366 = vpack.c.b16 %v346, %v345
    %v367 = vpack.c.b16 %v348, %v347
    %v368 = vpack.c.b16 %v350, %v349
    %v369 = vpack.c.b16 %v352, %v351
    %v370 = vpack.c.b16 %v354, %v353
    %387 = vmatprep.subr.bf16.mxu0 0
    %388 = vmatpush1.bf16.msra.mxu0 %v355
    %389 = vmatprep.subr.bf16.mxu0 0
    %390 = vmatpush1.bf16.msra.mxu0 %v356
    %391 = vmatprep.subr.bf16.mxu0 0
    %392 = vmatpush1.bf16.msra.mxu0 %v357
    %393 = vmatprep.subr.bf16.mxu0 0
    %394 = vmatpush1.bf16.msra.mxu0 %v358
    %395 = vmatprep.subr.bf16.mxu0 0
    %396 = vmatpush1.bf16.msra.mxu0 %v359
    %397 = vmatprep.subr.bf16.mxu0 0
    %398 = vmatpush1.bf16.msra.mxu0 %v360
    %399 = vmatprep.subr.bf16.mxu0 0
    %400 = vmatpush1.bf16.msra.mxu0 %v361
    %401 = vmatprep.subr.bf16.mxu0 0
    %402 = vmatpush1.bf16.msra.mxu0 %v362
    %403 = vmatprep.subr.bf16.mxu0 0
    %404 = vmatpush1.bf16.msra.mxu0 %v363
    %405 = vmatprep.subr.bf16.mxu0 0
    %406 = vmatpush1.bf16.msra.mxu0 %v364
    %407 = vmatprep.subr.bf16.mxu0 0
    %408 = vmatpush1.bf16.msra.mxu0 %v365
    %409 = vmatprep.subr.bf16.mxu0 0
    %410 = vmatpush1.bf16.msra.mxu0 %v366
    %411 = vmatprep.subr.bf16.mxu0 0
    %412 = vmatpush1.bf16.msra.mxu0 %v367
    %413 = vmatprep.subr.bf16.mxu0 0
    %414 = vmatpush1.bf16.msra.mxu0 %v368
    %415 = vmatprep.subr.bf16.mxu0 0
    %416 = vmatpush1.bf16.msra.mxu0 %v369
    %417 = vmatprep.subr.bf16.mxu0 0
    %418 = vmatpush1.bf16.msra.mxu0 %v370
    %419 = vmatprep.mubr.bf16.mxu0 %v251
    %420 = vmatmul.mubr.bf16.gmra.mrb[0].mxu0 %v250
    %v421 = vpop.f32.mrb[0].mxu0
    %v422 = vadd.f32 %v289, %v421
    %v423 = vpop.f32.mrb[0].mxu0
    %v424 = vpop.f32.mrb[0].mxu0
    %v425 = vpop.f32.mrb[0].mxu0
    %426 = vdwg.mxu0
    %vm427 = vcmask 130048
    %428 = vst.msk [vmem:[#allocation2] sm:$0xff] %vm427, %v422
    // Predicated region
    $region30: #{dqn_forward.1} parent=1 // pred_check
      _
    $region31: #{dqn_forward.1} parent=1 // pred_check_branch
      %430 = sbr.rel (0) target = $region33
    $region32: #{dqn_forward.1} parent=1 // pred_region
      %s432 = ssub.s32 128, 128
      %433 = vsyncadd [#allocation3], %s432
      %s435 = sshll.u32 [#allocation2], 4
      %s436 = int_to_ptr.vmem [resolvable:$true] %s435
      %438 = dma.vmem_to_hbm [thread:$0]  %s436, 128, %s7, [#allocation3]
    $region33: #{dqn_forward.1} parent=1 // pred_fallthru
      _
    // Predicated region
    $region34: #{dqn_forward.1} parent=1 // pred_check
      _
    $region35: #{dqn_forward.1} parent=1 // pred_check_branch
      %440 = sbr.rel (0) target = $region37
    $region36: #{dqn_forward.1} parent=1 // pred_region
      %441 = dma.done [#allocation3], 128
    $region37: #{dqn_forward.1} parent=1 // pred_fallthru
      _
    %442 = vsyncpa [#allocation3], 1

</llo_original>
